<compile_context>
chip_gen: v5e
topology: v5e:2x2
jax: 0.10.0
libtpu: 0.0.40
codegen_flags: <defaults>
</compile_context>

<pallas_src>
import functools
import math

import jax
import jax.numpy as jnp
from jax.experimental import pallas as pl
from jax.experimental.pallas import tpu as pltpu


_LANE = 128        # lane width: feature dims padded to this for dense loads/stores
_SUBLANE = 8       # sublane width: batch tiles must be a multiple of this
_TM_MAX = 1024     # max batch tile (per perf review: amortize per-step overhead)


def _round_up(n, m):
    return ((n + m - 1) // m) * m


def _actor_kernel(x_ref, w1_ref, b1_ref, w2_ref, b2_ref, w3_ref, b3_ref,
                  o_ref, h1_sc, h2_sc, *, min_action, max_action):
    # Layer 1: Linear(state_pad -> 256) + ReLU.  bf16 MXU path, f32 accumulate.
    h1 = jnp.dot(x_ref[...].astype(jnp.bfloat16), w1_ref[...],
                 preferred_element_type=jnp.float32)
    # Store the intermediate as bf16 so the reload feeds layer 2's MXU directly.
    h1_sc[...] = jnp.maximum(h1 + b1_ref[...], 0.0).astype(jnp.bfloat16)

    # Layer 2: Linear(256 -> 512) + ReLU.
    h2 = jnp.dot(h1_sc[...], w2_ref[...], preferred_element_type=jnp.float32)
    h2_sc[...] = jnp.maximum(h2 + b2_ref[...], 0.0).astype(jnp.bfloat16)

    # Output: Linear(512 -> action_num, lane-padded to 128) + clamp.
    a = jnp.dot(h2_sc[...], w3_ref[...], preferred_element_type=jnp.float32)
    o_ref[...] = jnp.clip(a + b3_ref[...], min_action, max_action).astype(o_ref.dtype)


def init_actor_params(key, state_num, action_num):
    """Init mirroring PyTorch nn.Linear default (U[-1/sqrt(fan_in), 1/sqrt(fan_in)]).

    Weights are stored transposed, i.e. (in_features, out_features), in f32.
    """
    keys = jax.random.split(key, 6)

    def linear(kw, kb, fan_in, fan_out):
        bound = 1.0 / math.sqrt(fan_in)
        w = jax.random.uniform(kw, (fan_in, fan_out), jnp.float32, -bound, bound)
        b = jax.random.uniform(kb, (fan_out,), jnp.float32, -bound, bound)
        return w, b

    w1, b1 = linear(keys[0], keys[1], state_num, 256)
    w2, b2 = linear(keys[2], keys[3], 256, 512)
    w3, b3 = linear(keys[4], keys[5], 512, action_num)
    return {"w1": w1, "b1": b1, "w2": w2, "b2": b2, "w3": w3, "b3": b3}


def prepare_actor_params(params):
    """One-time prep (call OUTSIDE the rollout/training hot loop):
      * cast weights to bf16,
      * zero-pad the layer-1 contraction dim (w1 rows) to a multiple of 128,
      * zero-pad the output layer to 128 lanes,
      * reshape biases to (1, n) f32 for broadcast adds.
    """
    state_num = params["w1"].shape[0]
    action_num = params["w3"].shape[1]
    state_pad = _round_up(max(state_num, _LANE), _LANE)
    out_pad = _round_up(max(action_num, _LANE), _LANE)

    w1 = jnp.pad(params["w1"], ((0, state_pad - state_num), (0, 0)))
    w3 = jnp.pad(params["w3"], ((0, 0), (0, out_pad - action_num)))
    b3 = jnp.pad(params["b3"], (0, out_pad - action_num))

    return {
        "w1": w1.astype(jnp.bfloat16),
        "b1": params["b1"].reshape(1, -1).astype(jnp.float32),
        "w2": params["w2"].astype(jnp.bfloat16),
        "b2": params["b2"].reshape(1, -1).astype(jnp.float32),
        "w3": w3.astype(jnp.bfloat16),
        "b3": b3.reshape(1, -1).astype(jnp.float32),
        "state_num": state_num,
        "action_num": action_num,
    }


def _pick_tile(batch):
    """Batch tile: big (amortizes per-step overhead), sublane-aligned, and with a
    grid of >= 2 (ideally even) steps when batch is large enough so both v7x
    TensorCores get work under dimension_semantics=("parallel",)."""
    tm = min(_TM_MAX, _round_up(batch, _SUBLANE))
    if batch > 2 * _SUBLANE and pl.cdiv(batch, tm) == 1:
        tm = _round_up(pl.cdiv(batch, 2), _SUBLANE)
    steps = pl.cdiv(batch, tm)
    if steps > 2 and steps % 2 == 1:
        tm = max(_SUBLANE, _round_up(pl.cdiv(batch, steps + 1), _SUBLANE))
        steps = pl.cdiv(batch, tm)
    return tm, steps


def actor_net_forward(x, prepared, min_action, max_action, *, trim_output=True):
    """Runs the ActorNet forward pass in one Pallas call.

    x: (batch, state_num) float32
    prepared: output of prepare_actor_params (bf16 weights, lane-padded dims).
    trim_output: if False, returns the lane-padded (batch, 128) buffer and skips
      the post-kernel slice copy (hot-path consumers can slice lazily).
    """
    batch, state_num = x.shape
    assert state_num == prepared["state_num"]
    state_pad = prepared["w1"].shape[0]     # 128 (lane-padded state dim)
    h1_dim = prepared["w1"].shape[1]        # 256
    h2_dim = prepared["w2"].shape[1]        # 512
    out_pad = prepared["w3"].shape[1]       # 128 (lane-padded action dim)
    action_num = prepared["action_num"]

    if state_num != state_pad:
        # Lane-pad the contraction dim (cheap: batch x 128 f32 copy; padded w1
        # rows are zero so the result is exact).
        # TODO(synk): have the upstream state producer emit pre-padded states to
        # drop this per-call copy entirely.
        x = jnp.pad(x, ((0, 0), (0, state_pad - state_num)))

    tm, steps = _pick_tile(batch)
    grid = (steps,)

    # Advisory cost hint so XLA can overlap this small custom call with
    # surrounding RL-step ops.
    flops = 2 * steps * tm * (state_pad * h1_dim + h1_dim * h2_dim + h2_dim * out_pad)
    bytes_accessed = (batch * state_pad * 4                                   # x
                      + 2 * (state_pad * h1_dim + h1_dim * h2_dim
                             + h2_dim * out_pad)                              # bf16 weights
                      + 4 * (h1_dim + h2_dim + out_pad)                       # biases
                      + batch * out_pad * 4)                                  # out

    kernel = functools.partial(
        _actor_kernel,
        min_action=float(min_action),
        max_action=float(max_action),
    )

    const = lambda i: (0, 0)   # weights/biases: same block every step -> VMEM resident

    out = pl.pallas_call(
        kernel,
        out_shape=jax.ShapeDtypeStruct((batch, out_pad), jnp.float32),
        grid=grid,
        in_specs=[
            pl.BlockSpec((tm, state_pad), lambda i: (i, 0)),   # x tile over batch
            pl.BlockSpec(prepared["w1"].shape, const),
            pl.BlockSpec(prepared["b1"].shape, const),
            pl.BlockSpec(prepared["w2"].shape, const),
            pl.BlockSpec(prepared["b2"].shape, const),
            pl.BlockSpec(prepared["w3"].shape, const),
            pl.BlockSpec(prepared["b3"].shape, const),
        ],
        out_specs=pl.BlockSpec((tm, out_pad), lambda i: (i, 0)),
        scratch_shapes=[
            pltpu.VMEM((tm, h1_dim), jnp.bfloat16),   # h1 intermediate (bf16)
            pltpu.VMEM((tm, h2_dim), jnp.bfloat16),   # h2 intermediate (bf16)
        ],
        compiler_params=pltpu.CompilerParams(
            dimension_semantics=("parallel",),        # megacore batch split on v7x
        ),
        cost_estimate=pl.CostEstimate(
            flops=int(flops), transcendentals=0, bytes_accessed=int(bytes_accessed)),
    )(x, prepared["w1"], prepared["b1"], prepared["w2"], prepared["b2"],
      prepared["w3"], prepared["b3"])

    if trim_output:
        return out[:, :action_num]
    return out


if __name__ == "__main__":
    key = jax.random.PRNGKey(0)
    k_params, k_x = jax.random.split(key)

    batch = 2
    state_num = 8
    action_num = 4
    min_action = -1.0
    max_action = 1.0

    params = init_actor_params(k_params, state_num, action_num)
    prepared = prepare_actor_params(params)   # one-time: bf16 cast + lane padding

    x = jax.random.normal(k_x, (batch, state_num), jnp.float32)

    action = actor_net_forward(x, prepared, min_action, max_action)
    action = jax.block_until_ready(action)

    # Reference in plain JAX mirroring the kernel's bf16 weight/activation rounding
    # (f32 accumulation, bf16 inter-layer activations).
    def bf16(v):
        return v.astype(jnp.bfloat16).astype(jnp.float32)

    h1 = jnp.maximum(bf16(x) @ bf16(params["w1"]) + params["b1"], 0.0)
    h2 = jnp.maximum(bf16(h1) @ bf16(params["w2"]) + params["b2"], 0.0)
    ref = jnp.clip(bf16(h2) @ bf16(params["w3"]) + params["b3"],
                   min_action, max_action)

    assert action.shape == (batch, action_num), action.shape
    assert jnp.allclose(action, ref, atol=2e-3), "mismatch vs reference"

    # Also exercise the padded-output hot path and a multi-step grid.
    xb = jax.random.normal(jax.random.PRNGKey(1), (40, state_num), jnp.float32)
    padded = jax.block_until_ready(
        actor_net_forward(xb, prepared, min_action, max_action, trim_output=False))
    assert padded.shape == (40, 128), padded.shape

    print("KERNEL_OK")
</pallas_src>

<mosaic_0001>
module attributes {stable_mosaic.version = 11 : i64} {
  func.func @_actor_kernel(%arg0: i32, %arg1: memref<8x128xf32, #tpu.memory_space<vmem>>, %arg2: memref<128x256xbf16, #tpu.memory_space<vmem>>, %arg3: memref<1x256xf32, #tpu.memory_space<vmem>>, %arg4: memref<256x512xbf16, #tpu.memory_space<vmem>>, %arg5: memref<1x512xf32, #tpu.memory_space<vmem>>, %arg6: memref<512x128xbf16, #tpu.memory_space<vmem>>, %arg7: memref<1x128xf32, #tpu.memory_space<vmem>>, %arg8: memref<8x128xf32, #tpu.memory_space<vmem>>, %arg9: memref<8x256xbf16, #tpu.memory_space<vmem>>, %arg10: memref<8x512xbf16, #tpu.memory_space<vmem>>) attributes {dimension_semantics = [#tpu.dimension_semantics<parallel>], iteration_bounds = array<i64: 1>, scalar_prefetch = 0 : i64, scratch_operands = 2 : i64, tpu.core_type = #tpu.core_type<tc>, window_params = [{transform_indices = @transform_0, window_bounds = array<i64: 8, 128>}, {pipeline_mode = #tpu.pipeline_mode<synchronous>, transform_indices = @transform_1, window_bounds = array<i64: 128, 256>}, {pipeline_mode = #tpu.pipeline_mode<synchronous>, transform_indices = @transform_2, window_bounds = array<i64: 1, 256>}, {pipeline_mode = #tpu.pipeline_mode<synchronous>, transform_indices = @transform_3, window_bounds = array<i64: 256, 512>}, {pipeline_mode = #tpu.pipeline_mode<synchronous>, transform_indices = @transform_4, window_bounds = array<i64: 1, 512>}, {pipeline_mode = #tpu.pipeline_mode<synchronous>, transform_indices = @transform_5, window_bounds = array<i64: 512, 128>}, {pipeline_mode = #tpu.pipeline_mode<synchronous>, transform_indices = @transform_6, window_bounds = array<i64: 1, 128>}, {transform_indices = @transform_7, window_bounds = array<i64: 8, 128>}]} {
    %c0 = arith.constant 0 : index
    %c0_0 = arith.constant 0 : index
    %0 = vector.load %arg1[%c0, %c0_0] : memref<8x128xf32, #tpu.memory_space<vmem>>, vector<8x128xf32>
    %1 = arith.truncf %0 : vector<8x128xf32> to vector<8x128xbf16>
    %c0_1 = arith.constant 0 : index
    %c0_2 = arith.constant 0 : index
    %2 = vector.load %arg2[%c0_1, %c0_2] : memref<128x256xbf16, #tpu.memory_space<vmem>>, vector<128x256xbf16>
    %cst = arith.constant dense<0.000000e+00> : vector<8x256xf32>
    %3 = tpu.matmul %1, %2, %cst {dimension_numbers = #tpu.dot_dimension_numbers<[1], [0], [0], [1], [0, 0, 1, 1], [], []>} : vector<8x128xbf16>, vector<128x256xbf16>, vector<8x256xf32> -> vector<8x256xf32>
    %c0_3 = arith.constant 0 : index
    %c0_4 = arith.constant 0 : index
    %4 = vector.load %arg3[%c0_3, %c0_4] : memref<1x256xf32, #tpu.memory_space<vmem>>, vector<1x256xf32>
    %5 = vector.broadcast %4 : vector<1x256xf32> to vector<8x256xf32>
    %6 = arith.addf %3, %5 : vector<8x256xf32>
    %cst_5 = arith.constant 0.000000e+00 : f32
    %7 = vector.broadcast %cst_5 : f32 to vector<8x256xf32>
    %8 = arith.maximumf %6, %7 : vector<8x256xf32>
    %9 = arith.truncf %8 : vector<8x256xf32> to vector<8x256xbf16>
    %c0_6 = arith.constant 0 : index
    %c0_7 = arith.constant 0 : index
    %10 = vector.load %arg9[%c0_6, %c0_7] : memref<8x256xbf16, #tpu.memory_space<vmem>>, vector<8x256xbf16>
    tpu.vector_store %arg9[%c0_6, %c0_7], %9 {strides = array<i32>} : memref<8x256xbf16, #tpu.memory_space<vmem>>, vector<8x256xbf16>,
    %c0_8 = arith.constant 0 : index
    %c0_9 = arith.constant 0 : index
    %11 = vector.load %arg9[%c0_8, %c0_9] : memref<8x256xbf16, #tpu.memory_space<vmem>>, vector<8x256xbf16>
    %c0_10 = arith.constant 0 : index
    %c0_11 = arith.constant 0 : index
    %12 = vector.load %arg4[%c0_10, %c0_11] : memref<256x512xbf16, #tpu.memory_space<vmem>>, vector<256x512xbf16>
    %cst_12 = arith.constant dense<0.000000e+00> : vector<8x512xf32>
    %13 = tpu.matmul %11, %12, %cst_12 {dimension_numbers = #tpu.dot_dimension_numbers<[1], [0], [0], [1], [0, 0, 1, 1], [], []>} : vector<8x256xbf16>, vector<256x512xbf16>, vector<8x512xf32> -> vector<8x512xf32>
    %c0_13 = arith.constant 0 : index
    %c0_14 = arith.constant 0 : index
    %14 = vector.load %arg5[%c0_13, %c0_14] : memref<1x512xf32, #tpu.memory_space<vmem>>, vector<1x512xf32>
    %15 = vector.broadcast %14 : vector<1x512xf32> to vector<8x512xf32>
    %16 = arith.addf %13, %15 : vector<8x512xf32>
    %cst_15 = arith.constant 0.000000e+00 : f32
    %17 = vector.broadcast %cst_15 : f32 to vector<8x512xf32>
    %18 = arith.maximumf %16, %17 : vector<8x512xf32>
    %19 = arith.truncf %18 : vector<8x512xf32> to vector<8x512xbf16>
    %c0_16 = arith.constant 0 : index
    %c0_17 = arith.constant 0 : index
    %20 = vector.load %arg10[%c0_16, %c0_17] : memref<8x512xbf16, #tpu.memory_space<vmem>>, vector<8x512xbf16>
    tpu.vector_store %arg10[%c0_16, %c0_17], %19 {strides = array<i32>} : memref<8x512xbf16, #tpu.memory_space<vmem>>, vector<8x512xbf16>,
    %c0_18 = arith.constant 0 : index
    %c0_19 = arith.constant 0 : index
    %21 = vector.load %arg10[%c0_18, %c0_19] : memref<8x512xbf16, #tpu.memory_space<vmem>>, vector<8x512xbf16>
    %c0_20 = arith.constant 0 : index
    %c0_21 = arith.constant 0 : index
    %22 = vector.load %arg6[%c0_20, %c0_21] : memref<512x128xbf16, #tpu.memory_space<vmem>>, vector<512x128xbf16>
    %cst_22 = arith.constant dense<0.000000e+00> : vector<8x128xf32>
    %23 = tpu.matmul %21, %22, %cst_22 {dimension_numbers = #tpu.dot_dimension_numbers<[1], [0], [0], [1], [0, 0, 1, 1], [], []>} : vector<8x512xbf16>, vector<512x128xbf16>, vector<8x128xf32> -> vector<8x128xf32>
    %c0_23 = arith.constant 0 : index
    %c0_24 = arith.constant 0 : index
    %24 = vector.load %arg7[%c0_23, %c0_24] : memref<1x128xf32, #tpu.memory_space<vmem>>, vector<1x128xf32>
    %25 = vector.broadcast %24 : vector<1x128xf32> to vector<8x128xf32>
    %26 = arith.addf %23, %25 : vector<8x128xf32>
    %cst_25 = arith.constant -1.000000e+00 : f32
    %cst_26 = arith.constant 1.000000e+00 : f32
    %27 = vector.broadcast %cst_25 : f32 to vector<8x128xf32>
    %28 = arith.maximumf %27, %26 : vector<8x128xf32>
    %29 = vector.broadcast %cst_26 : f32 to vector<8x128xf32>
    %30 = arith.minimumf %29, %28 : vector<8x128xf32>
    %c0_27 = arith.constant 0 : index
    %c0_28 = arith.constant 0 : index
    %31 = vector.load %arg8[%c0_27, %c0_28] : memref<8x128xf32, #tpu.memory_space<vmem>>, vector<8x128xf32>
    tpu.vector_store %arg8[%c0_27, %c0_28], %30 {strides = array<i32>} : memref<8x128xf32, #tpu.memory_space<vmem>>, vector<8x128xf32>,
    return
  }
  func.func @transform_0(%arg0: i32) -> (i32, i32) {
    %c0_i32 = arith.constant 0 : i32
    %c0_i32_0 = arith.constant 0 : i32
    return %arg0, %c0_i32 : i32, i32
  }
  func.func @transform_1(%arg0: i32) -> (i32, i32) {
    %c0_i32 = arith.constant 0 : i32
    %c0_i32_0 = arith.constant 0 : i32
    %c0_i32_1 = arith.constant 0 : i32
    return %c0_i32, %c0_i32_0 : i32, i32
  }
  func.func @transform_2(%arg0: i32) -> (i32, i32) {
    %c0_i32 = arith.constant 0 : i32
    %c0_i32_0 = arith.constant 0 : i32
    %c0_i32_1 = arith.constant 0 : i32
    return %c0_i32, %c0_i32_0 : i32, i32
  }
  func.func @transform_3(%arg0: i32) -> (i32, i32) {
    %c0_i32 = arith.constant 0 : i32
    %c0_i32_0 = arith.constant 0 : i32
    %c0_i32_1 = arith.constant 0 : i32
    return %c0_i32, %c0_i32_0 : i32, i32
  }
  func.func @transform_4(%arg0: i32) -> (i32, i32) {
    %c0_i32 = arith.constant 0 : i32
    %c0_i32_0 = arith.constant 0 : i32
    %c0_i32_1 = arith.constant 0 : i32
    return %c0_i32, %c0_i32_0 : i32, i32
  }
  func.func @transform_5(%arg0: i32) -> (i32, i32) {
    %c0_i32 = arith.constant 0 : i32
    %c0_i32_0 = arith.constant 0 : i32
    %c0_i32_1 = arith.constant 0 : i32
    return %c0_i32, %c0_i32_0 : i32, i32
  }
  func.func @transform_6(%arg0: i32) -> (i32, i32) {
    %c0_i32 = arith.constant 0 : i32
    %c0_i32_0 = arith.constant 0 : i32
    %c0_i32_1 = arith.constant 0 : i32
    return %c0_i32, %c0_i32_0 : i32, i32
  }
  func.func @transform_7(%arg0: i32) -> (i32, i32) {
    %c0_i32 = arith.constant 0 : i32
    %c0_i32_0 = arith.constant 0 : i32
    return %arg0, %c0_i32 : i32, i32
  }
}

</mosaic_0001>

<llo_original>
// kernel: tpu_custom_call.1
$region0: #{tpu_custom_call.1}
  #allocation0 [shape = 'u32[]', space=smem, size = 0x4, offset = 0x4, fixed_abs, tag = 'smem constant byte address 0x4 - core index']
  #allocation1 [shape = 'u32[72,128]{1,0:T(1,128)}', space=vmem, size = 0x9000, scoped, tag = 'internal scratch']
  #allocation2 [shape = 'bf16[8,256]{1,0:T(8,128)(2,1)}', space=vmem, size = 0x1000, scoped, tag = 'scratch operand']
  #allocation3 [shape = 'bf16[8,512]{1,0:T(8,128)(2,1)}', space=vmem, size = 0x2000, scoped, tag = 'scratch operand']
  %s0 = inlined_call_operand.hbm [shape: f32[2,128], index: 0, kind: input, shape index: {}]
  %s1 = inlined_call_operand.hbm [shape: bf16[128,256], index: 1, kind: input, shape index: {}]
  %s2 = inlined_call_operand.hbm [shape: f32[1,256], index: 2, kind: input, shape index: {}]
  %s3 = inlined_call_operand.hbm [shape: bf16[256,512], index: 3, kind: input, shape index: {}]
  %s4 = inlined_call_operand.hbm [shape: f32[1,512], index: 4, kind: input, shape index: {}]
  %s5 = inlined_call_operand.hbm [shape: bf16[512,128], index: 5, kind: input, shape index: {}]
  %s6 = inlined_call_operand.vmem [shape: f32[1,128], index: 6, kind: input, shape index: {}]
  %s7 = inlined_call_operand.hbm [shape: f32[2,128], index: 7, kind: output, shape index: {}]
  %s8 = sld [smem:[#allocation0]]
  $region62: #{tpu_custom_call.1} parent=0
    _
  %s10 = ssub.s32 1, %s8
  %s11 = scalar_select 0, %s10, %s8
  $region1: #{tpu_custom_call.1} parent=0
    #allocation4 [shape = 'u8[4096]{0}', space=vmem, size = 0x1000, scoped, tag = 'input window, operand 0, single buffered']
    #allocation5 [shape = 's32[1]{0}', space=sflag, size = 0x4, scoped, tag = 'scoped memory for tpu_custom_call.1']
    #allocation6 [shape = 's32[1]{0}', space=sflag, size = 0x4, scoped, tag = 'scoped memory for tpu_custom_call.1']
    #allocation7 [shape = 'u8[65536]{0}', space=vmem, size = 0x10000, scoped, tag = 'input window, operand 1, single buffered']
    #allocation8 [shape = 's32[1]{0}', space=sflag, size = 0x4, scoped, tag = 'scoped memory for tpu_custom_call.1']
    #allocation9 [shape = 'u8[1024]{0}', space=vmem, size = 0x400, scoped, tag = 'input window, operand 2, single buffered']
    #allocation10 [shape = 'u8[262144]{0}', space=vmem, size = 0x40000, scoped, tag = 'input window, operand 3, single buffered']
    #allocation11 [shape = 's32[1]{0}', space=sflag, size = 0x4, scoped, tag = 'scoped memory for tpu_custom_call.1']
    #allocation12 [shape = 'u8[2048]{0}', space=vmem, size = 0x800, scoped, tag = 'input window, operand 4, single buffered']
    #allocation13 [shape = 'u8[131072]{0}', space=vmem, size = 0x20000, scoped, tag = 'input window, operand 5, single buffered']
    #allocation14 [shape = 's32[1]{0}', space=sflag, size = 0x4, scoped, tag = 'scoped memory for tpu_custom_call.1']
    #allocation15 [shape = 'u8[4096]{0}', space=vmem, size = 0x1000, scoped, tag = 'output window, operand 0, single buffered']
    %12 = vsyncpa [#allocation5], 0
    %13 = vsyncpa [#allocation8], 0
    %14 = vsyncpa [#allocation11], 0
    %15 = vsyncpa [#allocation14], 0
    %16 = vsyncpa [#allocation6], 0
    // Predicated region
    $region2: #{tpu_custom_call.1} parent=1 // pred_check
      _
    $region3: #{tpu_custom_call.1} parent=1 // pred_check_branch
      %18 = sbr.rel (0) target = $region5
    $region4: #{tpu_custom_call.1} parent=1 // pred_region
      %20 = vsyncadd [#allocation5], 96
      %s21 = sshll.u32 %s0, 4
      %s22 = int_to_ptr.hbm [resolvable:$true] %s21
      %s23 = sshll.u32 [#allocation4], 4
      %s24 = int_to_ptr.vmem [resolvable:$true] %s23
      %29 = dma.hbm_to_vmem [thread:$0]  %s22, 32, %s24, [#allocation5], 32, 32, 2
    $region5: #{tpu_custom_call.1} parent=1 // pred_fallthru
      _
    // Predicated region
    $region6: #{tpu_custom_call.1} parent=1 // pred_check
      _
    $region7: #{tpu_custom_call.1} parent=1 // pred_check_branch
      %31 = sbr.rel (0) target = $region9
    $region8: #{tpu_custom_call.1} parent=1 // pred_region
      %33 = vsyncadd [#allocation8], 0
      %s34 = sshll.u32 %s1, 4
      %s35 = int_to_ptr.hbm [resolvable:$true] %s34
      %s36 = sshll.u32 [#allocation7], 4
      %s37 = int_to_ptr.vmem [resolvable:$true] %s36
      %42 = dma.hbm_to_vmem [thread:$0]  %s35, 2048, %s37, [#allocation8], 128, 128, 8
    $region9: #{tpu_custom_call.1} parent=1 // pred_fallthru
      _
    // Predicated region
    $region10: #{tpu_custom_call.1} parent=1 // pred_check
      _
    $region11: #{tpu_custom_call.1} parent=1 // pred_check_branch
      %44 = sbr.rel (0) target = $region13
    $region12: #{tpu_custom_call.1} parent=1 // pred_region
      %46 = vsyncadd [#allocation8], 0
      %s48 = sshll.u32 %s2, 4
      %s49 = int_to_ptr.hbm [resolvable:$true] %s48
      %s50 = sshll.u32 [#allocation9], 4
      %s51 = int_to_ptr.vmem [resolvable:$true] %s50
      %53 = dma.hbm_to_vmem [thread:$0]  %s49, 32, %s51, [#allocation8]
    $region13: #{tpu_custom_call.1} parent=1 // pred_fallthru
      _
    // Predicated region
    $region14: #{tpu_custom_call.1} parent=1 // pred_check
      _
    $region15: #{tpu_custom_call.1} parent=1 // pred_check_branch
      %55 = sbr.rel (0) target = $region17
    $region16: #{tpu_custom_call.1} parent=1 // pred_region
      %57 = vsyncadd [#allocation11], 0
      %s58 = sshll.u32 %s3, 4
      %s59 = int_to_ptr.hbm [resolvable:$true] %s58
      %s60 = sshll.u32 [#allocation10], 4
      %s61 = int_to_ptr.vmem [resolvable:$true] %s60
      %66 = dma.hbm_to_vmem [thread:$0]  %s59, 8192, %s61, [#allocation11], 256, 256, 16
    $region17: #{tpu_custom_call.1} parent=1 // pred_fallthru
      _
    // Predicated region
    $region18: #{tpu_custom_call.1} parent=1 // pred_check
      _
    $region19: #{tpu_custom_call.1} parent=1 // pred_check_branch
      %68 = sbr.rel (0) target = $region21
    $region20: #{tpu_custom_call.1} parent=1 // pred_region
      %70 = vsyncadd [#allocation11], 0
      %s72 = sshll.u32 %s4, 4
      %s73 = int_to_ptr.hbm [resolvable:$true] %s72
      %s74 = sshll.u32 [#allocation12], 4
      %s75 = int_to_ptr.vmem [resolvable:$true] %s74
      %77 = dma.hbm_to_vmem [thread:$0]  %s73, 64, %s75, [#allocation11]
    $region21: #{tpu_custom_call.1} parent=1 // pred_fallthru
      _
    // Predicated region
    $region22: #{tpu_custom_call.1} parent=1 // pred_check
      _
    $region23: #{tpu_custom_call.1} parent=1 // pred_check_branch
      %79 = sbr.rel (0) target = $region25
    $region24: #{tpu_custom_call.1} parent=1 // pred_region
      %81 = vsyncadd [#allocation14], 0
      %s82 = sshll.u32 %s5, 4
      %s83 = int_to_ptr.hbm [resolvable:$true] %s82
      %s84 = sshll.u32 [#allocation13], 4
      %s85 = int_to_ptr.vmem [resolvable:$true] %s84
      %90 = dma.hbm_to_vmem [thread:$0]  %s83, 4096, %s85, [#allocation14], 64, 64, 4
    $region25: #{tpu_custom_call.1} parent=1 // pred_fallthru
      _
    // Predicated region
    $region26: #{tpu_custom_call.1} parent=1 // pred_check
      _
    $region27: #{tpu_custom_call.1} parent=1 // pred_check_branch
      %92 = sbr.rel (0) target = $region29
    $region28: #{tpu_custom_call.1} parent=1 // pred_region
      _
    $region29: #{tpu_custom_call.1} parent=1 // pred_fallthru
      _
    // Predicated region
    $region30: #{tpu_custom_call.1} parent=1 // pred_check
      _
    $region31: #{tpu_custom_call.1} parent=1 // pred_check_branch
      %94 = sbr.rel (0) target = $region33
    $region32: #{tpu_custom_call.1} parent=1 // pred_region
      %96 = dma.done [#allocation5], 128
    $region33: #{tpu_custom_call.1} parent=1 // pred_fallthru
      _
    // Predicated region
    $region34: #{tpu_custom_call.1} parent=1 // pred_check
      _
    $region35: #{tpu_custom_call.1} parent=1 // pred_check_branch
      %98 = sbr.rel (0) target = $region37
    $region36: #{tpu_custom_call.1} parent=1 // pred_region
      %100 = dma.done [#allocation8], 2048
    $region37: #{tpu_custom_call.1} parent=1 // pred_fallthru
      _
    // Predicated region
    $region38: #{tpu_custom_call.1} parent=1 // pred_check
      _
    $region39: #{tpu_custom_call.1} parent=1 // pred_check_branch
      %102 = sbr.rel (0) target = $region41
    $region40: #{tpu_custom_call.1} parent=1 // pred_region
      %104 = dma.done [#allocation8], 32
    $region41: #{tpu_custom_call.1} parent=1 // pred_fallthru
      _
    // Predicated region
    $region42: #{tpu_custom_call.1} parent=1 // pred_check
      _
    $region43: #{tpu_custom_call.1} parent=1 // pred_check_branch
      %106 = sbr.rel (0) target = $region45
    $region44: #{tpu_custom_call.1} parent=1 // pred_region
      %108 = dma.done [#allocation11], 8192
    $region45: #{tpu_custom_call.1} parent=1 // pred_fallthru
      _
    // Predicated region
    $region46: #{tpu_custom_call.1} parent=1 // pred_check
      _
    $region47: #{tpu_custom_call.1} parent=1 // pred_check_branch
      %110 = sbr.rel (0) target = $region49
    $region48: #{tpu_custom_call.1} parent=1 // pred_region
      %112 = dma.done [#allocation11], 64
    $region49: #{tpu_custom_call.1} parent=1 // pred_fallthru
      _
    // Predicated region
    $region50: #{tpu_custom_call.1} parent=1 // pred_check
      _
    $region51: #{tpu_custom_call.1} parent=1 // pred_check_branch
      %114 = sbr.rel (0) target = $region53
    $region52: #{tpu_custom_call.1} parent=1 // pred_region
      %116 = dma.done [#allocation14], 4096
    $region53: #{tpu_custom_call.1} parent=1 // pred_fallthru
      _
    %v117 = vld [vmem:[#allocation4] sm:$0xff]
    %v118 = vpack.c.bf16 %v117, %v117
    %v119 = vld [vmem:[#allocation7] sm:$0xff]
    %v120 = vld [vmem:[#allocation7 + $0x8] sm:$0xff]
    %v121 = vld [vmem:[#allocation7 + $0x10] sm:$0xff]
    %v122 = vld [vmem:[#allocation7 + $0x18] sm:$0xff]
    %v123 = vld [vmem:[#allocation7 + $0x20] sm:$0xff]
    %v124 = vld [vmem:[#allocation7 + $0x28] sm:$0xff]
    %v125 = vld [vmem:[#allocation7 + $0x30] sm:$0xff]
    %v126 = vld [vmem:[#allocation7 + $0x38] sm:$0xff]
    %v127 = vld [vmem:[#allocation7 + $0x40] sm:$0xff]
    %v128 = vld [vmem:[#allocation7 + $0x48] sm:$0xff]
    %v129 = vld [vmem:[#allocation7 + $0x50] sm:$0xff]
    %v130 = vld [vmem:[#allocation7 + $0x58] sm:$0xff]
    %v131 = vld [vmem:[#allocation7 + $0x60] sm:$0xff]
    %v132 = vld [vmem:[#allocation7 + $0x68] sm:$0xff]
    %v133 = vld [vmem:[#allocation7 + $0x70] sm:$0xff]
    %v134 = vld [vmem:[#allocation7 + $0x78] sm:$0xff]
    %v135 = vld [vmem:[#allocation9] sm:$0x3]
    %v137 = vperm.slane %v135, 0
    %v138 = vperm.slane %v135, 1
    %v157 = vunpack.c.l.b16 %v119
    %v158 = vunpack.c.h.b16 %v119
    %v159 = vunpack.c.l.b16 %v120
    %v160 = vunpack.c.h.b16 %v120
    %v161 = vunpack.c.l.b16 %v121
    %v162 = vunpack.c.h.b16 %v121
    %v163 = vunpack.c.l.b16 %v122
    %v164 = vunpack.c.h.b16 %v122
    %v165 = vunpack.c.l.b16 %v123
    %v166 = vunpack.c.h.b16 %v123
    %v167 = vunpack.c.l.b16 %v124
    %v168 = vunpack.c.h.b16 %v124
    %v169 = vunpack.c.l.b16 %v125
    %v170 = vunpack.c.h.b16 %v125
    %v171 = vunpack.c.l.b16 %v126
    %v172 = vunpack.c.h.b16 %v126
    %v173 = vunpack.c.l.b16 %v127
    %v174 = vunpack.c.h.b16 %v127
    %v175 = vunpack.c.l.b16 %v128
    %v176 = vunpack.c.h.b16 %v128
    %v177 = vunpack.c.l.b16 %v129
    %v178 = vunpack.c.h.b16 %v129
    %v179 = vunpack.c.l.b16 %v130
    %v180 = vunpack.c.h.b16 %v130
    %v181 = vunpack.c.l.b16 %v131
    %v182 = vunpack.c.h.b16 %v131
    %v183 = vunpack.c.l.b16 %v132
    %v184 = vunpack.c.h.b16 %v132
    %v185 = vunpack.c.l.b16 %v133
    %v186 = vunpack.c.h.b16 %v133
    %v187 = vunpack.c.l.b16 %v134
    %v188 = vunpack.c.h.b16 %v134
    %v189 = vpack.c.b16 %v159, %v157
    %v190 = vpack.c.b16 %v160, %v158
    %v191 = vpack.c.b16 %v163, %v161
    %v192 = vpack.c.b16 %v164, %v162
    %v193 = vpack.c.b16 %v167, %v165
    %v194 = vpack.c.b16 %v168, %v166
    %v195 = vpack.c.b16 %v171, %v169
    %v196 = vpack.c.b16 %v172, %v170
    %v197 = vpack.c.b16 %v175, %v173
    %v198 = vpack.c.b16 %v176, %v174
    %v199 = vpack.c.b16 %v179, %v177
    %v200 = vpack.c.b16 %v180, %v178
    %v201 = vpack.c.b16 %v183, %v181
    %v202 = vpack.c.b16 %v184, %v182
    %v203 = vpack.c.b16 %v187, %v185
    %v204 = vpack.c.b16 %v188, %v186
    %221 = vmatpush.bf16.msra.mxu0 %v203
    %222 = vmatpush.bf16.msra.mxu0 %v201
    %223 = vmatpush.bf16.msra.mxu0 %v199
    %224 = vmatpush.bf16.msra.mxu0 %v197
    %225 = vmatpush.bf16.msra.mxu0 %v195
    %226 = vmatpush.bf16.msra.mxu0 %v193
    %227 = vmatpush.bf16.msra.mxu0 %v191
    %228 = vmatpush.bf16.msra.mxu0 %v189
    %229 = vmatmul.bf16.gmra.mxu0 %v118
    %v230 = vpop.f32.mrf.mxu0
    %v231 = vadd.f32 %v137, %v230
    %v232 = vpop.f32.mrf.mxu0
    %233 = vdwg.mxu0
    %234 = vmatpush.bf16.msra.mxu0 %v204
    %235 = vmatpush.bf16.msra.mxu0 %v202
    %236 = vmatpush.bf16.msra.mxu0 %v200
    %237 = vmatpush.bf16.msra.mxu0 %v198
    %238 = vmatpush.bf16.msra.mxu0 %v196
    %239 = vmatpush.bf16.msra.mxu0 %v194
    %240 = vmatpush.bf16.msra.mxu0 %v192
    %241 = vmatpush.bf16.msra.mxu0 %v190
    %242 = vmatmul.bf16.gmra.mxu0 %v118
    %v243 = vpop.f32.mrf.mxu0
    %v244 = vadd.f32 %v138, %v243
    %v245 = vpop.f32.mrf.mxu0
    %246 = vdwg.mxu0
    %v247 = vmax.f32 %v231, 0.0
    %v248 = vmax.f32 %v244, 0.0
    %v249 = vpack.c.bf16 %v248, %v247
    %250 = vst [vmem:[#allocation2] sm:$0xff] %v249
    %v251 = vld [vmem:[#allocation2] sm:$0xff]
    %v252 = vld [vmem:[#allocation10] sm:$0xff]
    %v253 = vld [vmem:[#allocation10 + $0x8] sm:$0xff]
    %v254 = vld [vmem:[#allocation10 + $0x10] sm:$0xff]
    %v255 = vld [vmem:[#allocation10 + $0x18] sm:$0xff]
    %v256 = vld [vmem:[#allocation10 + $0x20] sm:$0xff]
    %v257 = vld [vmem:[#allocation10 + $0x28] sm:$0xff]
    %v258 = vld [vmem:[#allocation10 + $0x30] sm:$0xff]
    %v259 = vld [vmem:[#allocation10 + $0x38] sm:$0xff]
    %v260 = vld [vmem:[#allocation10 + $0x40] sm:$0xff]
    %v261 = vld [vmem:[#allocation10 + $0x48] sm:$0xff]
    %v262 = vld [vmem:[#allocation10 + $0x50] sm:$0xff]
    %v263 = vld [vmem:[#allocation10 + $0x58] sm:$0xff]
    %v264 = vld [vmem:[#allocation10 + $0x60] sm:$0xff]
    %v265 = vld [vmem:[#allocation10 + $0x68] sm:$0xff]
    %v266 = vld [vmem:[#allocation10 + $0x70] sm:$0xff]
    %v267 = vld [vmem:[#allocation10 + $0x78] sm:$0xff]
    %v268 = vld [vmem:[#allocation10 + $0x80] sm:$0xff]
    %v269 = vld [vmem:[#allocation10 + $0x88] sm:$0xff]
    %v270 = vld [vmem:[#allocation10 + $0x90] sm:$0xff]
    %v271 = vld [vmem:[#allocation10 + $0x98] sm:$0xff]
    %v272 = vld [vmem:[#allocation10 + $0xa0] sm:$0xff]
    %v273 = vld [vmem:[#allocation10 + $0xa8] sm:$0xff]
    %v274 = vld [vmem:[#allocation10 + $0xb0] sm:$0xff]
    %v275 = vld [vmem:[#allocation10 + $0xb8] sm:$0xff]
    %v276 = vld [vmem:[#allocation10 + $0xc0] sm:$0xff]
    %v277 = vld [vmem:[#allocation10 + $0xc8] sm:$0xff]
    %v278 = vld [vmem:[#allocation10 + $0xd0] sm:$0xff]
    %v279 = vld [vmem:[#allocation10 + $0xd8] sm:$0xff]
    %v280 = vld [vmem:[#allocation10 + $0xe0] sm:$0xff]
    %v281 = vld [vmem:[#allocation10 + $0xe8] sm:$0xff]
    %v282 = vld [vmem:[#allocation10 + $0xf0] sm:$0xff]
    %v283 = vld [vmem:[#allocation10 + $0xf8] sm:$0xff]
    %v284 = vld [vmem:[#allocation10 + $0x100] sm:$0xff]
    %v285 = vld [vmem:[#allocation10 + $0x108] sm:$0xff]
    %v286 = vld [vmem:[#allocation10 + $0x110] sm:$0xff]
    %v287 = vld [vmem:[#allocation10 + $0x118] sm:$0xff]
    %v288 = vld [vmem:[#allocation10 + $0x120] sm:$0xff]
    %v289 = vld [vmem:[#allocation10 + $0x128] sm:$0xff]
    %v290 = vld [vmem:[#allocation10 + $0x130] sm:$0xff]
    %v291 = vld [vmem:[#allocation10 + $0x138] sm:$0xff]
    %v292 = vld [vmem:[#allocation10 + $0x140] sm:$0xff]
    %v293 = vld [vmem:[#allocation10 + $0x148] sm:$0xff]
    %v294 = vld [vmem:[#allocation10 + $0x150] sm:$0xff]
    %v295 = vld [vmem:[#allocation10 + $0x158] sm:$0xff]
    %v296 = vld [vmem:[#allocation10 + $0x160] sm:$0xff]
    %v297 = vld [vmem:[#allocation10 + $0x168] sm:$0xff]
    %v298 = vld [vmem:[#allocation10 + $0x170] sm:$0xff]
    %v299 = vld [vmem:[#allocation10 + $0x178] sm:$0xff]
    %v300 = vld [vmem:[#allocation10 + $0x180] sm:$0xff]
    %v301 = vld [vmem:[#allocation10 + $0x188] sm:$0xff]
    %v302 = vld [vmem:[#allocation10 + $0x190] sm:$0xff]
    %v303 = vld [vmem:[#allocation10 + $0x198] sm:$0xff]
    %v304 = vld [vmem:[#allocation10 + $0x1a0] sm:$0xff]
    %v305 = vld [vmem:[#allocation10 + $0x1a8] sm:$0xff]
    %v306 = vld [vmem:[#allocation10 + $0x1b0] sm:$0xff]
    %v307 = vld [vmem:[#allocation10 + $0x1b8] sm:$0xff]
    %v308 = vld [vmem:[#allocation10 + $0x1c0] sm:$0xff]
    %v309 = vld [vmem:[#allocation10 + $0x1c8] sm:$0xff]
    %v310 = vld [vmem:[#allocation10 + $0x1d0] sm:$0xff]
    %v311 = vld [vmem:[#allocation10 + $0x1d8] sm:$0xff]
    %v312 = vld [vmem:[#allocation10 + $0x1e0] sm:$0xff]
    %v313 = vld [vmem:[#allocation10 + $0x1e8] sm:$0xff]
    %v314 = vld [vmem:[#allocation10 + $0x1f0] sm:$0xff]
    %v315 = vld [vmem:[#allocation10 + $0x1f8] sm:$0xff]
    %v316 = vld [vmem:[#allocation12] sm:$0xf]
    %v318 = vperm.slane %v316, 0
    %v319 = vperm.slane %v316, 1
    %v320 = vperm.slane %v316, 2
    %v321 = vperm.slane %v316, 3
    %v327 = vunpack.c.l.b16 %v251
    %v328 = vunpack.c.h.b16 %v251
    %v329 = vpack.c.b16 %v327, %v327
    %v330 = vpack.c.b16 %v328, %v328
    %v397 = vunpack.c.l.b16 %v252
    %v398 = vunpack.c.h.b16 %v252
    %v399 = vunpack.c.l.b16 %v253
    %v400 = vunpack.c.h.b16 %v253
    %v401 = vunpack.c.l.b16 %v254
    %v402 = vunpack.c.h.b16 %v254
    %v403 = vunpack.c.l.b16 %v255
    %v404 = vunpack.c.h.b16 %v255
    %v405 = vunpack.c.l.b16 %v256
    %v406 = vunpack.c.h.b16 %v256
    %v407 = vunpack.c.l.b16 %v257
    %v408 = vunpack.c.h.b16 %v257
    %v409 = vunpack.c.l.b16 %v258
    %v410 = vunpack.c.h.b16 %v258
    %v411 = vunpack.c.l.b16 %v259
    %v412 = vunpack.c.h.b16 %v259
    %v413 = vunpack.c.l.b16 %v260
    %v414 = vunpack.c.h.b16 %v260
    %v415 = vunpack.c.l.b16 %v261
    %v416 = vunpack.c.h.b16 %v261
    %v417 = vunpack.c.l.b16 %v262
    %v418 = vunpack.c.h.b16 %v262
    %v419 = vunpack.c.l.b16 %v263
    %v420 = vunpack.c.h.b16 %v263
    %v421 = vunpack.c.l.b16 %v264
    %v422 = vunpack.c.h.b16 %v264
    %v423 = vunpack.c.l.b16 %v265
    %v424 = vunpack.c.h.b16 %v265
    %v425 = vunpack.c.l.b16 %v266
    %v426 = vunpack.c.h.b16 %v266
    %v427 = vunpack.c.l.b16 %v267
    %v428 = vunpack.c.h.b16 %v267
    %v429 = vunpack.c.l.b16 %v268
    %v430 = vunpack.c.h.b16 %v268
    %v431 = vunpack.c.l.b16 %v269
    %v432 = vunpack.c.h.b16 %v269
    %v433 = vunpack.c.l.b16 %v270
    %v434 = vunpack.c.h.b16 %v270
    %v435 = vunpack.c.l.b16 %v271
    %v436 = vunpack.c.h.b16 %v271
    %v437 = vunpack.c.l.b16 %v272
    %v438 = vunpack.c.h.b16 %v272
    %v439 = vunpack.c.l.b16 %v273
    %v440 = vunpack.c.h.b16 %v273
    %v441 = vunpack.c.l.b16 %v274
    %v442 = vunpack.c.h.b16 %v274
    %v443 = vunpack.c.l.b16 %v275
    %v444 = vunpack.c.h.b16 %v275
    %v445 = vunpack.c.l.b16 %v276
    %v446 = vunpack.c.h.b16 %v276
    %v447 = vunpack.c.l.b16 %v277
    %v448 = vunpack.c.h.b16 %v277
    %v449 = vunpack.c.l.b16 %v278
    %v450 = vunpack.c.h.b16 %v278
    %v451 = vunpack.c.l.b16 %v279
    %v452 = vunpack.c.h.b16 %v279
    %v453 = vunpack.c.l.b16 %v280
    %v454 = vunpack.c.h.b16 %v280
    %v455 = vunpack.c.l.b16 %v281
    %v456 = vunpack.c.h.b16 %v281
    %v457 = vunpack.c.l.b16 %v282
    %v458 = vunpack.c.h.b16 %v282
    %v459 = vunpack.c.l.b16 %v283
    %v460 = vunpack.c.h.b16 %v283
    %v461 = vunpack.c.l.b16 %v284
    %v462 = vunpack.c.h.b16 %v284
    %v463 = vunpack.c.l.b16 %v285
    %v464 = vunpack.c.h.b16 %v285
    %v465 = vunpack.c.l.b16 %v286
    %v466 = vunpack.c.h.b16 %v286
    %v467 = vunpack.c.l.b16 %v287
    %v468 = vunpack.c.h.b16 %v287
    %v469 = vunpack.c.l.b16 %v288
    %v470 = vunpack.c.h.b16 %v288
    %v471 = vunpack.c.l.b16 %v289
    %v472 = vunpack.c.h.b16 %v289
    %v473 = vunpack.c.l.b16 %v290
    %v474 = vunpack.c.h.b16 %v290
    %v475 = vunpack.c.l.b16 %v291
    %v476 = vunpack.c.h.b16 %v291
    %v477 = vunpack.c.l.b16 %v292
    %v478 = vunpack.c.h.b16 %v292
    %v479 = vunpack.c.l.b16 %v293
    %v480 = vunpack.c.h.b16 %v293
    %v481 = vunpack.c.l.b16 %v294
    %v482 = vunpack.c.h.b16 %v294
    %v483 = vunpack.c.l.b16 %v295
    %v484 = vunpack.c.h.b16 %v295
    %v485 = vunpack.c.l.b16 %v296
    %v486 = vunpack.c.h.b16 %v296
    %v487 = vunpack.c.l.b16 %v297
    %v488 = vunpack.c.h.b16 %v297
    %v489 = vunpack.c.l.b16 %v298
    %v490 = vunpack.c.h.b16 %v298
    %v491 = vunpack.c.l.b16 %v299
    %v492 = vunpack.c.h.b16 %v299
    %v493 = vunpack.c.l.b16 %v300
    %v494 = vunpack.c.h.b16 %v300
    %v495 = vunpack.c.l.b16 %v301
    %v496 = vunpack.c.h.b16 %v301
    %v497 = vunpack.c.l.b16 %v302
    %v498 = vunpack.c.h.b16 %v302
    %v499 = vunpack.c.l.b16 %v303
    %v500 = vunpack.c.h.b16 %v303
    %v501 = vunpack.c.l.b16 %v304
    %v502 = vunpack.c.h.b16 %v304
    %v503 = vunpack.c.l.b16 %v305
    %v504 = vunpack.c.h.b16 %v305
    %v505 = vunpack.c.l.b16 %v306
    %v506 = vunpack.c.h.b16 %v306
    %v507 = vunpack.c.l.b16 %v307
    %v508 = vunpack.c.h.b16 %v307
    %v509 = vunpack.c.l.b16 %v308
    %v510 = vunpack.c.h.b16 %v308
    %v511 = vunpack.c.l.b16 %v309
    %v512 = vunpack.c.h.b16 %v309
    %v513 = vunpack.c.l.b16 %v310
    %v514 = vunpack.c.h.b16 %v310
    %v515 = vunpack.c.l.b16 %v311
    %v516 = vunpack.c.h.b16 %v311
    %v517 = vunpack.c.l.b16 %v312
    %v518 = vunpack.c.h.b16 %v312
    %v519 = vunpack.c.l.b16 %v313
    %v520 = vunpack.c.h.b16 %v313
    %v521 = vunpack.c.l.b16 %v314
    %v522 = vunpack.c.h.b16 %v314
    %v523 = vunpack.c.l.b16 %v315
    %v524 = vunpack.c.h.b16 %v315
    %v525 = vpack.c.b16 %v401, %v397
    %v526 = vpack.c.b16 %v402, %v398
    %v527 = vpack.c.b16 %v403, %v399
    %v528 = vpack.c.b16 %v404, %v400
    %v529 = vpack.c.b16 %v409, %v405
    %v530 = vpack.c.b16 %v410, %v406
    %v531 = vpack.c.b16 %v411, %v407
    %v532 = vpack.c.b16 %v412, %v408
    %v533 = vpack.c.b16 %v417, %v413
    %v534 = vpack.c.b16 %v418, %v414
    %v535 = vpack.c.b16 %v419, %v415
    %v536 = vpack.c.b16 %v420, %v416
    %v537 = vpack.c.b16 %v425, %v421
    %v538 = vpack.c.b16 %v426, %v422
    %v539 = vpack.c.b16 %v427, %v423
    %v540 = vpack.c.b16 %v428, %v424
    %v541 = vpack.c.b16 %v433, %v429
    %v542 = vpack.c.b16 %v434, %v430
    %v543 = vpack.c.b16 %v435, %v431
    %v544 = vpack.c.b16 %v436, %v432
    %v545 = vpack.c.b16 %v441, %v437
    %v546 = vpack.c.b16 %v442, %v438
    %v547 = vpack.c.b16 %v443, %v439
    %v548 = vpack.c.b16 %v444, %v440
    %v549 = vpack.c.b16 %v449, %v445
    %v550 = vpack.c.b16 %v450, %v446
    %v551 = vpack.c.b16 %v451, %v447
    %v552 = vpack.c.b16 %v452, %v448
    %v553 = vpack.c.b16 %v457, %v453
    %v554 = vpack.c.b16 %v458, %v454
    %v555 = vpack.c.b16 %v459, %v455
    %v556 = vpack.c.b16 %v460, %v456
    %v557 = vpack.c.b16 %v465, %v461
    %v558 = vpack.c.b16 %v466, %v462
    %v559 = vpack.c.b16 %v467, %v463
    %v560 = vpack.c.b16 %v468, %v464
    %v561 = vpack.c.b16 %v473, %v469
    %v562 = vpack.c.b16 %v474, %v470
    %v563 = vpack.c.b16 %v475, %v471
    %v564 = vpack.c.b16 %v476, %v472
    %v565 = vpack.c.b16 %v481, %v477
    %v566 = vpack.c.b16 %v482, %v478
    %v567 = vpack.c.b16 %v483, %v479
    %v568 = vpack.c.b16 %v484, %v480
    %v569 = vpack.c.b16 %v489, %v485
    %v570 = vpack.c.b16 %v490, %v486
    %v571 = vpack.c.b16 %v491, %v487
    %v572 = vpack.c.b16 %v492, %v488
    %v573 = vpack.c.b16 %v497, %v493
    %v574 = vpack.c.b16 %v498, %v494
    %v575 = vpack.c.b16 %v499, %v495
    %v576 = vpack.c.b16 %v500, %v496
    %v577 = vpack.c.b16 %v505, %v501
    %v578 = vpack.c.b16 %v506, %v502
    %v579 = vpack.c.b16 %v507, %v503
    %v580 = vpack.c.b16 %v508, %v504
    %v581 = vpack.c.b16 %v513, %v509
    %v582 = vpack.c.b16 %v514, %v510
    %v583 = vpack.c.b16 %v515, %v511
    %v584 = vpack.c.b16 %v516, %v512
    %v585 = vpack.c.b16 %v521, %v517
    %v586 = vpack.c.b16 %v522, %v518
    %v587 = vpack.c.b16 %v523, %v519
    %v588 = vpack.c.b16 %v524, %v520
    %653 = vmatpush.bf16.msra.mxu0 %v553
    %654 = vmatpush.bf16.msra.mxu0 %v549
    %655 = vmatpush.bf16.msra.mxu0 %v545
    %656 = vmatpush.bf16.msra.mxu0 %v541
    %657 = vmatpush.bf16.msra.mxu0 %v537
    %658 = vmatpush.bf16.msra.mxu0 %v533
    %659 = vmatpush.bf16.msra.mxu0 %v529
    %660 = vmatpush.bf16.msra.mxu0 %v525
    %661 = vmatmul.bf16.gmra.mxu0 %v329
    %v662 = vpop.f32.mrf.mxu0
    %v663 = vadd.f32 %v318, %v662
    %v664 = vpop.f32.mrf.mxu0
    %665 = vdwg.mxu0
    %666 = vmatpush.bf16.msra.mxu0 %v585
    %667 = vmatpush.bf16.msra.mxu0 %v581
    %668 = vmatpush.bf16.msra.mxu0 %v577
    %669 = vmatpush.bf16.msra.mxu0 %v573
    %670 = vmatpush.bf16.msra.mxu0 %v569
    %671 = vmatpush.bf16.msra.mxu0 %v565
    %672 = vmatpush.bf16.msra.mxu0 %v561
    %673 = vmatpush.bf16.msra.mxu0 %v557
    %674 = vmatmul.bf16.gmra.mxu0 %v330
    %v675 = vpop.f32.mrf.mxu0
    %v676 = vadd.f32 %v663, %v675
    %v677 = vpop.f32.mrf.mxu0
    %678 = vdwg.mxu0
    %679 = vmatpush.bf16.msra.mxu0 %v554
    %680 = vmatpush.bf16.msra.mxu0 %v550
    %681 = vmatpush.bf16.msra.mxu0 %v546
    %682 = vmatpush.bf16.msra.mxu0 %v542
    %683 = vmatpush.bf16.msra.mxu0 %v538
    %684 = vmatpush.bf16.msra.mxu0 %v534
    %685 = vmatpush.bf16.msra.mxu0 %v530
    %686 = vmatpush.bf16.msra.mxu0 %v526
    %687 = vmatmul.bf16.gmra.mxu0 %v329
    %v688 = vpop.f32.mrf.mxu0
    %v689 = vadd.f32 %v319, %v688
    %v690 = vpop.f32.mrf.mxu0
    %691 = vdwg.mxu0
    %692 = vmatpush.bf16.msra.mxu0 %v586
    %693 = vmatpush.bf16.msra.mxu0 %v582
    %694 = vmatpush.bf16.msra.mxu0 %v578
    %695 = vmatpush.bf16.msra.mxu0 %v574
    %696 = vmatpush.bf16.msra.mxu0 %v570
    %697 = vmatpush.bf16.msra.mxu0 %v566
    %698 = vmatpush.bf16.msra.mxu0 %v562
    %699 = vmatpush.bf16.msra.mxu0 %v558
    %700 = vmatmul.bf16.gmra.mxu0 %v330
    %v701 = vpop.f32.mrf.mxu0
    %v702 = vadd.f32 %v689, %v701
    %v703 = vpop.f32.mrf.mxu0
    %704 = vdwg.mxu0
    %705 = vmatpush.bf16.msra.mxu0 %v555
    %706 = vmatpush.bf16.msra.mxu0 %v551
    %707 = vmatpush.bf16.msra.mxu0 %v547
    %708 = vmatpush.bf16.msra.mxu0 %v543
    %709 = vmatpush.bf16.msra.mxu0 %v539
    %710 = vmatpush.bf16.msra.mxu0 %v535
    %711 = vmatpush.bf16.msra.mxu0 %v531
    %712 = vmatpush.bf16.msra.mxu0 %v527
    %713 = vmatmul.bf16.gmra.mxu0 %v329
    %v714 = vpop.f32.mrf.mxu0
    %v715 = vadd.f32 %v320, %v714
    %v716 = vpop.f32.mrf.mxu0
    %717 = vdwg.mxu0
    %718 = vmatpush.bf16.msra.mxu0 %v587
    %719 = vmatpush.bf16.msra.mxu0 %v583
    %720 = vmatpush.bf16.msra.mxu0 %v579
    %721 = vmatpush.bf16.msra.mxu0 %v575
    %722 = vmatpush.bf16.msra.mxu0 %v571
    %723 = vmatpush.bf16.msra.mxu0 %v567
    %724 = vmatpush.bf16.msra.mxu0 %v563
    %725 = vmatpush.bf16.msra.mxu0 %v559
    %726 = vmatmul.bf16.gmra.mxu0 %v330
    %v727 = vpop.f32.mrf.mxu0
    %v728 = vadd.f32 %v715, %v727
    %v729 = vpop.f32.mrf.mxu0
    %730 = vdwg.mxu0
    %731 = vmatpush.bf16.msra.mxu0 %v556
    %732 = vmatpush.bf16.msra.mxu0 %v552
    %733 = vmatpush.bf16.msra.mxu0 %v548
    %734 = vmatpush.bf16.msra.mxu0 %v544
    %735 = vmatpush.bf16.msra.mxu0 %v540
    %736 = vmatpush.bf16.msra.mxu0 %v536
    %737 = vmatpush.bf16.msra.mxu0 %v532
    %738 = vmatpush.bf16.msra.mxu0 %v528
    %739 = vmatmul.bf16.gmra.mxu0 %v329
    %v740 = vpop.f32.mrf.mxu0
    %v741 = vadd.f32 %v321, %v740
    %v742 = vpop.f32.mrf.mxu0
    %743 = vdwg.mxu0
    %744 = vmatpush.bf16.msra.mxu0 %v588
    %745 = vmatpush.bf16.msra.mxu0 %v584
    %746 = vmatpush.bf16.msra.mxu0 %v580
    %747 = vmatpush.bf16.msra.mxu0 %v576
    %748 = vmatpush.bf16.msra.mxu0 %v572
    %749 = vmatpush.bf16.msra.mxu0 %v568
    %750 = vmatpush.bf16.msra.mxu0 %v564
    %751 = vmatpush.bf16.msra.mxu0 %v560
    %752 = vmatmul.bf16.gmra.mxu0 %v330
    %v753 = vpop.f32.mrf.mxu0
    %v754 = vadd.f32 %v741, %v753
    %v755 = vpop.f32.mrf.mxu0
    %756 = vdwg.mxu0
    %v757 = vmax.f32 %v676, 0.0
    %v758 = vmax.f32 %v702, 0.0
    %v759 = vmax.f32 %v728, 0.0
    %v760 = vmax.f32 %v754, 0.0
    %v761 = vpack.c.bf16 %v758, %v757
    %v762 = vpack.c.bf16 %v760, %v759
    %763 = vst [vmem:[#allocation3] sm:$0xff] %v761
    %764 = vst [vmem:[#allocation3 + $0x8] sm:$0xff] %v762
    %v765 = vld [vmem:[#allocation3] sm:$0xff]
    %v766 = vld [vmem:[#allocation3 + $0x8] sm:$0xff]
    %v767 = vld [vmem:[#allocation13] sm:$0xf]
    %v768 = vld [vmem:[#allocation13 + $0x4] sm:$0xf]
    %v769 = vld [vmem:[#allocation13 + $0x8] sm:$0xf]
    %v770 = vld [vmem:[#allocation13 + $0xc] sm:$0xf]
    %v771 = vld [vmem:[#allocation13 + $0x10] sm:$0xf]
    %v772 = vld [vmem:[#allocation13 + $0x14] sm:$0xf]
    %v773 = vld [vmem:[#allocation13 + $0x18] sm:$0xf]
    %v774 = vld [vmem:[#allocation13 + $0x1c] sm:$0xf]
    %v775 = vld [vmem:[#allocation13 + $0x20] sm:$0xf]
    %v776 = vld [vmem:[#allocation13 + $0x24] sm:$0xf]
    %v777 = vld [vmem:[#allocation13 + $0x28] sm:$0xf]
    %v778 = vld [vmem:[#allocation13 + $0x2c] sm:$0xf]
    %v779 = vld [vmem:[#allocation13 + $0x30] sm:$0xf]
    %v780 = vld [vmem:[#allocation13 + $0x34] sm:$0xf]
    %v781 = vld [vmem:[#allocation13 + $0x38] sm:$0xf]
    %v782 = vld [vmem:[#allocation13 + $0x3c] sm:$0xf]
    %v783 = vld [vmem:[#allocation13 + $0x40] sm:$0xf]
    %v784 = vld [vmem:[#allocation13 + $0x44] sm:$0xf]
    %v785 = vld [vmem:[#allocation13 + $0x48] sm:$0xf]
    %v786 = vld [vmem:[#allocation13 + $0x4c] sm:$0xf]
    %v787 = vld [vmem:[#allocation13 + $0x50] sm:$0xf]
    %v788 = vld [vmem:[#allocation13 + $0x54] sm:$0xf]
    %v789 = vld [vmem:[#allocation13 + $0x58] sm:$0xf]
    %v790 = vld [vmem:[#allocation13 + $0x5c] sm:$0xf]
    %v791 = vld [vmem:[#allocation13 + $0x60] sm:$0xf]
    %v792 = vld [vmem:[#allocation13 + $0x64] sm:$0xf]
    %v793 = vld [vmem:[#allocation13 + $0x68] sm:$0xf]
    %v794 = vld [vmem:[#allocation13 + $0x6c] sm:$0xf]
    %v795 = vld [vmem:[#allocation13 + $0x70] sm:$0xf]
    %v796 = vld [vmem:[#allocation13 + $0x74] sm:$0xf]
    %v797 = vld [vmem:[#allocation13 + $0x78] sm:$0xf]
    %v798 = vld [vmem:[#allocation13 + $0x7c] sm:$0xf]
    %v799 = vld [vmem:[#allocation13 + $0x80] sm:$0xf]
    %v800 = vld [vmem:[#allocation13 + $0x84] sm:$0xf]
    %v801 = vld [vmem:[#allocation13 + $0x88] sm:$0xf]
    %v802 = vld [vmem:[#allocation13 + $0x8c] sm:$0xf]
    %v803 = vld [vmem:[#allocation13 + $0x90] sm:$0xf]
    %v804 = vld [vmem:[#allocation13 + $0x94] sm:$0xf]
    %v805 = vld [vmem:[#allocation13 + $0x98] sm:$0xf]
    %v806 = vld [vmem:[#allocation13 + $0x9c] sm:$0xf]
    %v807 = vld [vmem:[#allocation13 + $0xa0] sm:$0xf]
    %v808 = vld [vmem:[#allocation13 + $0xa4] sm:$0xf]
    %v809 = vld [vmem:[#allocation13 + $0xa8] sm:$0xf]
    %v810 = vld [vmem:[#allocation13 + $0xac] sm:$0xf]
    %v811 = vld [vmem:[#allocation13 + $0xb0] sm:$0xf]
    %v812 = vld [vmem:[#allocation13 + $0xb4] sm:$0xf]
    %v813 = vld [vmem:[#allocation13 + $0xb8] sm:$0xf]
    %v814 = vld [vmem:[#allocation13 + $0xbc] sm:$0xf]
    %v815 = vld [vmem:[#allocation13 + $0xc0] sm:$0xf]
    %v816 = vld [vmem:[#allocation13 + $0xc4] sm:$0xf]
    %v817 = vld [vmem:[#allocation13 + $0xc8] sm:$0xf]
    %v818 = vld [vmem:[#allocation13 + $0xcc] sm:$0xf]
    %v819 = vld [vmem:[#allocation13 + $0xd0] sm:$0xf]
    %v820 = vld [vmem:[#allocation13 + $0xd4] sm:$0xf]
    %v821 = vld [vmem:[#allocation13 + $0xd8] sm:$0xf]
    %v822 = vld [vmem:[#allocation13 + $0xdc] sm:$0xf]
    %v823 = vld [vmem:[#allocation13 + $0xe0] sm:$0xf]
    %v824 = vld [vmem:[#allocation13 + $0xe4] sm:$0xf]
    %v825 = vld [vmem:[#allocation13 + $0xe8] sm:$0xf]
    %v826 = vld [vmem:[#allocation13 + $0xec] sm:$0xf]
    %v827 = vld [vmem:[#allocation13 + $0xf0] sm:$0xf]
    %v828 = vld [vmem:[#allocation13 + $0xf4] sm:$0xf]
    %v829 = vld [vmem:[#allocation13 + $0xf8] sm:$0xf]
    %v830 = vld [vmem:[#allocation13 + $0xfc] sm:$0xf]
    %v831 = vld [vmem:[%s6] sm:$0x1]
    %v833 = vperm.slane %v831, 0
    %v837 = vunpack.c.l.b16 %v765
    %v838 = vunpack.c.h.b16 %v765
    %v839 = vunpack.c.l.b16 %v766
    %v840 = vunpack.c.h.b16 %v766
    %v841 = vpack.c.b16 %v837, %v837
    %v842 = vpack.c.b16 %v838, %v838
    %v843 = vpack.c.b16 %v839, %v839
    %v844 = vpack.c.b16 %v840, %v840
    %v913 = vunpack.c.l.b16 %v767
    %v914 = vunpack.c.l.b16 %v768
    %v915 = vunpack.c.l.b16 %v769
    %v916 = vunpack.c.l.b16 %v770
    %v917 = vunpack.c.l.b16 %v771
    %v918 = vunpack.c.l.b16 %v772
    %v919 = vunpack.c.l.b16 %v773
    %v920 = vunpack.c.l.b16 %v774
    %v921 = vunpack.c.l.b16 %v775
    %v922 = vunpack.c.l.b16 %v776
    %v923 = vunpack.c.l.b16 %v777
    %v924 = vunpack.c.l.b16 %v778
    %v925 = vunpack.c.l.b16 %v779
    %v926 = vunpack.c.l.b16 %v780
    %v927 = vunpack.c.l.b16 %v781
    %v928 = vunpack.c.l.b16 %v782
    %v929 = vunpack.c.l.b16 %v783
    %v930 = vunpack.c.l.b16 %v784
    %v931 = vunpack.c.l.b16 %v785
    %v932 = vunpack.c.l.b16 %v786
    %v933 = vunpack.c.l.b16 %v787
    %v934 = vunpack.c.l.b16 %v788
    %v935 = vunpack.c.l.b16 %v789
    %v936 = vunpack.c.l.b16 %v790
    %v937 = vunpack.c.l.b16 %v791
    %v938 = vunpack.c.l.b16 %v792
    %v939 = vunpack.c.l.b16 %v793
    %v940 = vunpack.c.l.b16 %v794
    %v941 = vunpack.c.l.b16 %v795
    %v942 = vunpack.c.l.b16 %v796
    %v943 = vunpack.c.l.b16 %v797
    %v944 = vunpack.c.l.b16 %v798
    %v945 = vunpack.c.l.b16 %v799
    %v946 = vunpack.c.l.b16 %v800
    %v947 = vunpack.c.l.b16 %v801
    %v948 = vunpack.c.l.b16 %v802
    %v949 = vunpack.c.l.b16 %v803
    %v950 = vunpack.c.l.b16 %v804
    %v951 = vunpack.c.l.b16 %v805
    %v952 = vunpack.c.l.b16 %v806
    %v953 = vunpack.c.l.b16 %v807
    %v954 = vunpack.c.l.b16 %v808
    %v955 = vunpack.c.l.b16 %v809
    %v956 = vunpack.c.l.b16 %v810
    %v957 = vunpack.c.l.b16 %v811
    %v958 = vunpack.c.l.b16 %v812
    %v959 = vunpack.c.l.b16 %v813
    %v960 = vunpack.c.l.b16 %v814
    %v961 = vunpack.c.l.b16 %v815
    %v962 = vunpack.c.l.b16 %v816
    %v963 = vunpack.c.l.b16 %v817
    %v964 = vunpack.c.l.b16 %v818
    %v965 = vunpack.c.l.b16 %v819
    %v966 = vunpack.c.l.b16 %v820
    %v967 = vunpack.c.l.b16 %v821
    %v968 = vunpack.c.l.b16 %v822
    %v969 = vunpack.c.l.b16 %v823
    %v970 = vunpack.c.l.b16 %v824
    %v971 = vunpack.c.l.b16 %v825
    %v972 = vunpack.c.l.b16 %v826
    %v973 = vunpack.c.l.b16 %v827
    %v974 = vunpack.c.l.b16 %v828
    %v975 = vunpack.c.l.b16 %v829
    %v976 = vunpack.c.l.b16 %v830
    %v977 = vpack.c.b16 %v914, %v913
    %v978 = vpack.c.b16 %v916, %v915
    %v979 = vpack.c.b16 %v918, %v917
    %v980 = vpack.c.b16 %v920, %v919
    %v981 = vpack.c.b16 %v922, %v921
    %v982 = vpack.c.b16 %v924, %v923
    %v983 = vpack.c.b16 %v926, %v925
    %v984 = vpack.c.b16 %v928, %v927
    %v985 = vpack.c.b16 %v930, %v929
    %v986 = vpack.c.b16 %v932, %v931
    %v987 = vpack.c.b16 %v934, %v933
    %v988 = vpack.c.b16 %v936, %v935
    %v989 = vpack.c.b16 %v938, %v937
    %v990 = vpack.c.b16 %v940, %v939
    %v991 = vpack.c.b16 %v942, %v941
    %v992 = vpack.c.b16 %v944, %v943
    %v993 = vpack.c.b16 %v946, %v945
    %v994 = vpack.c.b16 %v948, %v947
    %v995 = vpack.c.b16 %v950, %v949
    %v996 = vpack.c.b16 %v952, %v951
    %v997 = vpack.c.b16 %v954, %v953
    %v998 = vpack.c.b16 %v956, %v955
    %v999 = vpack.c.b16 %v958, %v957
    %v1000 = vpack.c.b16 %v960, %v959
    %v1001 = vpack.c.b16 %v962, %v961
    %v1002 = vpack.c.b16 %v964, %v963
    %v1003 = vpack.c.b16 %v966, %v965
    %v1004 = vpack.c.b16 %v968, %v967
    %v1005 = vpack.c.b16 %v970, %v969
    %v1006 = vpack.c.b16 %v972, %v971
    %v1007 = vpack.c.b16 %v974, %v973
    %v1008 = vpack.c.b16 %v976, %v975
    %1041 = vmatpush.bf16.msra.mxu0 %v984
    %1042 = vmatpush.bf16.msra.mxu0 %v983
    %1043 = vmatpush.bf16.msra.mxu0 %v982
    %1044 = vmatpush.bf16.msra.mxu0 %v981
    %1045 = vmatpush.bf16.msra.mxu0 %v980
    %1046 = vmatpush.bf16.msra.mxu0 %v979
    %1047 = vmatpush.bf16.msra.mxu0 %v978
    %1048 = vmatpush.bf16.msra.mxu0 %v977
    %1049 = vmatmul.bf16.gmra.mxu0 %v841
    %v1050 = vpop.f32.mrf.mxu0
    %v1051 = vadd.f32 %v833, %v1050
    %v1052 = vpop.f32.mrf.mxu0
    %1053 = vdwg.mxu0
    %1054 = vmatpush.bf16.msra.mxu0 %v992
    %1055 = vmatpush.bf16.msra.mxu0 %v991
    %1056 = vmatpush.bf16.msra.mxu0 %v990
    %1057 = vmatpush.bf16.msra.mxu0 %v989
    %1058 = vmatpush.bf16.msra.mxu0 %v988
    %1059 = vmatpush.bf16.msra.mxu0 %v987
    %1060 = vmatpush.bf16.msra.mxu0 %v986
    %1061 = vmatpush.bf16.msra.mxu0 %v985
    %1062 = vmatmul.bf16.gmra.mxu0 %v842
    %v1063 = vpop.f32.mrf.mxu0
    %v1064 = vadd.f32 %v1051, %v1063
    %v1065 = vpop.f32.mrf.mxu0
    %1066 = vdwg.mxu0
    %1067 = vmatpush.bf16.msra.mxu0 %v1000
    %1068 = vmatpush.bf16.msra.mxu0 %v999
    %1069 = vmatpush.bf16.msra.mxu0 %v998
    %1070 = vmatpush.bf16.msra.mxu0 %v997
    %1071 = vmatpush.bf16.msra.mxu0 %v996
    %1072 = vmatpush.bf16.msra.mxu0 %v995
    %1073 = vmatpush.bf16.msra.mxu0 %v994
    %1074 = vmatpush.bf16.msra.mxu0 %v993
    %1075 = vmatmul.bf16.gmra.mxu0 %v843
    %v1076 = vpop.f32.mrf.mxu0
    %v1077 = vadd.f32 %v1064, %v1076
    %v1078 = vpop.f32.mrf.mxu0
    %1079 = vdwg.mxu0
    %1080 = vmatpush.bf16.msra.mxu0 %v1008
    %1081 = vmatpush.bf16.msra.mxu0 %v1007
    %1082 = vmatpush.bf16.msra.mxu0 %v1006
    %1083 = vmatpush.bf16.msra.mxu0 %v1005
    %1084 = vmatpush.bf16.msra.mxu0 %v1004
    %1085 = vmatpush.bf16.msra.mxu0 %v1003
    %1086 = vmatpush.bf16.msra.mxu0 %v1002
    %1087 = vmatpush.bf16.msra.mxu0 %v1001
    %1088 = vmatmul.bf16.gmra.mxu0 %v844
    %v1089 = vpop.f32.mrf.mxu0
    %v1090 = vadd.f32 %v1077, %v1089
    %v1091 = vpop.f32.mrf.mxu0
    %1092 = vdwg.mxu0
    %v1093 = vmax.f32 %v1090, -1.0
    %v1094 = vmin.f32 %v1093, 1.0
    %1095 = vst [vmem:[#allocation15] sm:$0xff] %v1094
    // Predicated region
    $region54: #{tpu_custom_call.1} parent=1 // pred_check
      _
    $region55: #{tpu_custom_call.1} parent=1 // pred_check_branch
      %1097 = sbr.rel (0) target = $region57
    $region56: #{tpu_custom_call.1} parent=1 // pred_region
      %1099 = vsyncadd [#allocation6], 96
      %s1100 = sshll.u32 [#allocation15], 4
      %s1101 = int_to_ptr.vmem [resolvable:$true] %s1100
      %s1102 = sshll.u32 %s7, 4
      %s1103 = int_to_ptr.hbm [resolvable:$true] %s1102
      %1108 = dma.vmem_to_hbm [thread:$0]  %s1101, 32, %s1103, [#allocation6], 32, 32, 2
    $region57: #{tpu_custom_call.1} parent=1 // pred_fallthru
      _
    // Predicated region
    $region58: #{tpu_custom_call.1} parent=1 // pred_check
      _
    $region59: #{tpu_custom_call.1} parent=1 // pred_check_branch
      %1110 = sbr.rel (0) target = $region61
    $region60: #{tpu_custom_call.1} parent=1 // pred_region
      %1112 = dma.done [#allocation6], 128
    $region61: #{tpu_custom_call.1} parent=1 // pred_fallthru
      _
    %1113 = vsyncpa [#allocation5], 1
    %1114 = vsyncpa [#allocation8], 1
    %1115 = vsyncpa [#allocation11], 1
    %1116 = vsyncpa [#allocation14], 1
    %1117 = vsyncpa [#allocation6], 1

</llo_original>
